<compile_context>
chip_gen: v7x
topology: tpu7x:2x2x1
jax: 0.10.0
libtpu: 0.0.40
codegen_flags: <defaults>
</compile_context>

<pallas_src>
import functools

import jax
import jax.numpy as jnp
from jax.experimental import pallas as pl
from jax.experimental.pallas import tpu as pltpu

IMAGE_SUM = 1.0
SHIFT_MAX = 0.25

_LANE = 512        # slab lane width (multiple of 128 -> lane-dense, unmasked vst)
_TILE_ROWS = 512   # rows per grid step -> 512x512 f32 = 1 MiB per buffer


def _round_up(x, m):
    return (x + m - 1) // m * m


def _slab_geometry(n_elems):
    """Padded (rows, tile_rows) for a lane-dense (rows, _LANE) slab covering n_elems."""
    rows = max(1, -(-n_elems // _LANE))
    tile_rows = min(_TILE_ROWS, _round_up(rows, 8))   # sublane-aligned tile
    rows = _round_up(rows, tile_rows)                 # grid divides evenly
    return rows, tile_rows


def _to_slab(x_flat, rows):
    pad = rows * _LANE - x_flat.shape[0]
    if pad:
        x_flat = jnp.pad(x_flat, (0, pad))
    return x_flat.reshape(rows, _LANE)


# ----------------------------------------------------------------------------
# sparse=True branch: out = features * scale + shift_max * z   (z ~ N(0, 1))
# ----------------------------------------------------------------------------
def _rescale_sparse_kernel(scale_ref, x_ref, z_ref, o_ref, *, shift_max):
    # scale_ref is a (1,) f32 scalar in SMEM (scalar prefetch); pure fused
    # multiply-add per element -> memory-bound, fully pipelineable.
    o_ref[...] = x_ref[...] * scale_ref[0] + jnp.float32(shift_max) * z_ref[...]


def rescale_sparse(features, batch_idx, key,
                   image_sum=IMAGE_SUM, shift_max=SHIFT_MAX, batch_size=None):
    """features: (N, C) f32 SCN feature matrix.
    batch_idx: (N, 1) i32 (batch column of get_spatial_locations()[:, -1]).
    key: jax PRNG key for the gaussian noise.
    """
    n, c = features.shape
    features = features.astype(jnp.float32)

    # ---- hoisted global normalization (plain JAX; a handful of scalar ops) ----
    if batch_size is None:
        # batch_size = max(batch locations) + 1, as in the PyTorch module.
        batch_size = jnp.max(batch_idx[:, -1]) + 1
    batch_size_f = jnp.asarray(batch_size, jnp.float32)
    feature_norm = jnp.sum(features) / batch_size_f
    scale = (jnp.float32(image_sum) / feature_norm).reshape(1)   # (1,) f32

    # ---- lane-dense slab + host-side standard-normal noise ----
    flat = features.reshape(-1)
    rows, tile_rows = _slab_geometry(flat.shape[0])
    x2d = _to_slab(flat, rows)
    z2d = jax.random.normal(key, (rows, _LANE), dtype=jnp.float32)

    kernel = functools.partial(_rescale_sparse_kernel, shift_max=shift_max)
    out2d = pl.pallas_call(
        kernel,
        out_shape=jax.ShapeDtypeStruct((rows, _LANE), jnp.float32),
        grid_spec=pltpu.PrefetchScalarGridSpec(
            num_scalar_prefetch=1,
            grid=(rows // tile_rows,),
            in_specs=[
                pl.BlockSpec((tile_rows, _LANE), lambda i, scale: (i, 0)),
                pl.BlockSpec((tile_rows, _LANE), lambda i, scale: (i, 0)),
            ],
            out_specs=pl.BlockSpec((tile_rows, _LANE), lambda i, scale: (i, 0)),
        ),
        compiler_params=pltpu.CompilerParams(
            dimension_semantics=("parallel",)),
    )(scale, x2d, z2d)
    return out2d.reshape(-1)[: n * c].reshape(n, c)


# ----------------------------------------------------------------------------
# sparse=False branch: out = x * (1 - 0.5*shift_max + shift_max * U[0,1))
# ----------------------------------------------------------------------------
def _rescale_dense_kernel(x_ref, u_ref, o_ref, *, shift_max):
    c0 = jnp.float32(1.0 - 0.5 * shift_max)
    c1 = jnp.float32(shift_max)
    o_ref[...] = x_ref[...] * (c0 + c1 * u_ref[...])


def rescale_dense(x_nchw, key, shift_max=SHIFT_MAX):
    """x_nchw: (N, C, H, W) f32 dense tensor.  Returns the same shape."""
    orig_shape = x_nchw.shape
    flat = x_nchw.reshape(-1).astype(jnp.float32)
    n_elems = flat.shape[0]

    rows, tile_rows = _slab_geometry(n_elems)
    x2d = _to_slab(flat, rows)
    u2d = jax.random.uniform(key, (rows, _LANE), dtype=jnp.float32)

    kernel = functools.partial(_rescale_dense_kernel, shift_max=shift_max)
    out2d = pl.pallas_call(
        kernel,
        out_shape=jax.ShapeDtypeStruct((rows, _LANE), jnp.float32),
        grid_spec=pltpu.PrefetchScalarGridSpec(
            num_scalar_prefetch=0,
            grid=(rows // tile_rows,),
            in_specs=[
                pl.BlockSpec((tile_rows, _LANE), lambda i: (i, 0)),
                pl.BlockSpec((tile_rows, _LANE), lambda i: (i, 0)),
            ],
            out_specs=pl.BlockSpec((tile_rows, _LANE), lambda i: (i, 0)),
        ),
        compiler_params=pltpu.CompilerParams(
            dimension_semantics=("parallel",)),
    )(x2d, u2d)
    return out2d.reshape(-1)[:n_elems].reshape(orig_shape)


# ----------------------------------------------------------------------------
if __name__ == "__main__":
    key = jax.random.PRNGKey(0)
    k_feat, k_bidx, k_dense, k_noise, k_rand = jax.random.split(key, 5)

    # --- sparse branch: 64 active voxels, 4 feature channels, batch=2 ---
    n_active, channels, batch = 64, 4, 2
    features = jax.random.uniform(k_feat, (n_active, channels),
                                  dtype=jnp.float32) + 0.1
    batch_idx = jax.random.randint(k_bidx, (n_active, 1), 0, batch,
                                   dtype=jnp.int32)
    batch_idx = batch_idx.at[-1, 0].set(batch - 1)   # ensure max index = batch-1

    out_sparse = jax.block_until_ready(
        rescale_sparse(features, batch_idx, k_noise))

    # exact reference (replicates the wrapper's noise draw)
    feature_norm = jnp.sum(features) / jnp.float32(batch)
    rows_s, _ = _slab_geometry(n_active * channels)
    z_ref = jax.random.normal(k_noise, (rows_s, _LANE), dtype=jnp.float32)
    z_ref = z_ref.reshape(-1)[: n_active * channels].reshape(n_active, channels)
    expected_sparse = IMAGE_SUM * (features / feature_norm) + SHIFT_MAX * z_ref
    assert out_sparse.shape == (n_active, channels)
    assert bool(jnp.all(jnp.isfinite(out_sparse)))
    assert bool(jnp.allclose(out_sparse, expected_sparse, rtol=1e-5, atol=1e-5))

    # --- dense branch: NCHW (2, 4, 16, 16) ---
    x = jax.random.normal(k_dense, (2, 4, 16, 16), dtype=jnp.float32)
    out_dense = jax.block_until_ready(rescale_dense(x, k_rand))

    rows_d, _ = _slab_geometry(x.size)
    u_ref = jax.random.uniform(k_rand, (rows_d, _LANE), dtype=jnp.float32)
    u_ref = u_ref.reshape(-1)[: x.size].reshape(x.shape)
    expected_dense = x * (1.0 - 0.5 * SHIFT_MAX + SHIFT_MAX * u_ref)
    assert out_dense.shape == x.shape
    assert bool(jnp.all(jnp.isfinite(out_dense)))
    assert bool(jnp.allclose(out_dense, expected_dense, rtol=1e-5, atol=1e-5))

    print("KERNEL_OK")
</pallas_src>

<mosaic_0001>
module attributes {stable_mosaic.version = 11 : i64} {
  func.func @_rescale_sparse_kernel(%arg0: i32, %arg1: memref<1xf32, #tpu.memory_space<smem>>, %arg2: memref<8x512xf32, #tpu.memory_space<vmem>>, %arg3: memref<8x512xf32, #tpu.memory_space<vmem>>, %arg4: memref<8x512xf32, #tpu.memory_space<vmem>>) attributes {dimension_semantics = [#tpu.dimension_semantics<parallel>], iteration_bounds = array<i64: 1>, scalar_prefetch = 1 : i64, scratch_operands = 0 : i64, tpu.core_type = #tpu.core_type<tc>, window_params = [{transform_indices = @transform_0, window_bounds = array<i64: 8, 512>}, {transform_indices = @transform_1, window_bounds = array<i64: 8, 512>}, {transform_indices = @transform_2, window_bounds = array<i64: 8, 512>}]} {
    %c0 = arith.constant 0 : index
    %c0_0 = arith.constant 0 : index
    %0 = vector.load %arg2[%c0, %c0_0] : memref<8x512xf32, #tpu.memory_space<vmem>>, vector<8x512xf32>
    %c0_1 = arith.constant 0 : index
    %1 = memref.load %arg1[%c0_1] : memref<1xf32, #tpu.memory_space<smem>>
    %2 = vector.broadcast %1 : f32 to vector<8x512xf32>
    %3 = arith.mulf %0, %2 : vector<8x512xf32>
    %c0_2 = arith.constant 0 : index
    %c0_3 = arith.constant 0 : index
    %4 = vector.load %arg3[%c0_2, %c0_3] : memref<8x512xf32, #tpu.memory_space<vmem>>, vector<8x512xf32>
    %cst = arith.constant 2.500000e-01 : f32
    %5 = vector.broadcast %cst : f32 to vector<8x512xf32>
    %6 = arith.mulf %5, %4 : vector<8x512xf32>
    %7 = arith.addf %3, %6 : vector<8x512xf32>
    %c0_4 = arith.constant 0 : index
    %c0_5 = arith.constant 0 : index
    %8 = vector.load %arg4[%c0_4, %c0_5] : memref<8x512xf32, #tpu.memory_space<vmem>>, vector<8x512xf32>
    tpu.vector_store %arg4[%c0_4, %c0_5], %7 {strides = array<i32>} : memref<8x512xf32, #tpu.memory_space<vmem>>, vector<8x512xf32>,
    return
  }
  func.func @transform_0(%arg0: i32, %arg1: memref<1xf32, #tpu.memory_space<smem>>) -> (i32, i32) {
    %c0_i32 = arith.constant 0 : i32
    %c0_i32_0 = arith.constant 0 : i32
    return %arg0, %c0_i32 : i32, i32
  }
  func.func @transform_1(%arg0: i32, %arg1: memref<1xf32, #tpu.memory_space<smem>>) -> (i32, i32) {
    %c0_i32 = arith.constant 0 : i32
    %c0_i32_0 = arith.constant 0 : i32
    return %arg0, %c0_i32 : i32, i32
  }
  func.func @transform_2(%arg0: i32, %arg1: memref<1xf32, #tpu.memory_space<smem>>) -> (i32, i32) {
    %c0_i32 = arith.constant 0 : i32
    %c0_i32_0 = arith.constant 0 : i32
    return %arg0, %c0_i32 : i32, i32
  }
}

</mosaic_0001>

<llo_original>
// kernel: tpu_custom_call.1
$region0: #{tpu_custom_call.1}
  #allocation0 [shape = 'u32[]', space=smem, size = 0x4, offset = 0x4, fixed_abs, tag = 'smem constant byte address 0x4 - core index']
  #allocation1 [shape = 'u32[144,128]{1,0:T(1,128)}', space=vmem, size = 0x12000, scoped, tag = 'internal scratch']
  #allocation2 [shape = 's32[1]{0}', space=sflag, size = 0x4, scoped, tag = 'scoped memory for tpu_custom_call.1']
  #allocation3 [shape = 'f32[1]{0:T(128)S(6)}', space=smem, size = 0x200, scoped, tag = 'prefetched SMEM operand 0']
  %s0 = inlined_call_operand.<no memory space> [shape: f32[1], index: 0, kind: input, shape index: {}]
  %s1 = inlined_call_operand.hbm [shape: f32[8,512], index: 1, kind: input, shape index: {}]
  %s2 = inlined_call_operand.hbm [shape: f32[8,512], index: 2, kind: input, shape index: {}]
  %s3 = inlined_call_operand.hbm [shape: f32[8,512], index: 3, kind: output, shape index: {}]
  %s4 = sld [smem:[#allocation0]]
  $region26: #{tpu_custom_call.1} parent=0
    _
  %s6 = ssub.s32 1, %s4
  %s7 = scalar_select 0, %s6, %s4
  %8 = sst [smem:[#allocation3]] %s0
  $region1: #{tpu_custom_call.1} parent=0
    #allocation4 [shape = 'u8[16384]{0}', space=vmem, size = 0x4000, scoped, tag = 'input window, operand 1, single buffered']
    #allocation5 [shape = 's32[1]{0}', space=sflag, size = 0x4, scoped, tag = 'scoped memory for tpu_custom_call.1']
    #allocation6 [shape = 's32[1]{0}', space=sflag, size = 0x4, scoped, tag = 'scoped memory for tpu_custom_call.1']
    #allocation7 [shape = 'u8[16384]{0}', space=vmem, size = 0x4000, scoped, tag = 'input window, operand 2, single buffered']
    #allocation8 [shape = 's32[1]{0}', space=sflag, size = 0x4, scoped, tag = 'scoped memory for tpu_custom_call.1']
    #allocation9 [shape = 'u8[16384]{0}', space=vmem, size = 0x4000, scoped, tag = 'output window, operand 0, single buffered']
    %9 = vsyncpa [#allocation5], 0
    %10 = vsyncpa [#allocation8], 0
    %11 = vsyncpa [#allocation6], 0
    // Predicated region
    $region2: #{tpu_custom_call.1} parent=1 // pred_check
      _
    $region3: #{tpu_custom_call.1} parent=1 // pred_check_branch
      %13 = sbr.rel (0) target = $region5
    $region4: #{tpu_custom_call.1} parent=1 // pred_region
      %s15 = ssub.s32 512, 512
      %16 = vsyncadd [#allocation5], %s15
      %s18 = sshll.u32 [#allocation4], 4
      %s19 = int_to_ptr.vmem [resolvable:$true] %s18
      %21 = dma.hbm_to_vmem [thread:$0]  %s1, 512, %s19, [#allocation5]
    $region5: #{tpu_custom_call.1} parent=1 // pred_fallthru
      _
    // Predicated region
    $region6: #{tpu_custom_call.1} parent=1 // pred_check
      _
    $region7: #{tpu_custom_call.1} parent=1 // pred_check_branch
      %23 = sbr.rel (0) target = $region9
    $region8: #{tpu_custom_call.1} parent=1 // pred_region
      %s25 = ssub.s32 512, 512
      %26 = vsyncadd [#allocation8], %s25
      %s28 = sshll.u32 [#allocation7], 4
      %s29 = int_to_ptr.vmem [resolvable:$true] %s28
      %31 = dma.hbm_to_vmem [thread:$0]  %s2, 512, %s29, [#allocation8]
    $region9: #{tpu_custom_call.1} parent=1 // pred_fallthru
      _
    // Predicated region
    $region10: #{tpu_custom_call.1} parent=1 // pred_check
      _
    $region11: #{tpu_custom_call.1} parent=1 // pred_check_branch
      %33 = sbr.rel (0) target = $region13
    $region12: #{tpu_custom_call.1} parent=1 // pred_region
      %34 = dma.done [#allocation5], 512
    $region13: #{tpu_custom_call.1} parent=1 // pred_fallthru
      _
    // Predicated region
    $region14: #{tpu_custom_call.1} parent=1 // pred_check
      _
    $region15: #{tpu_custom_call.1} parent=1 // pred_check_branch
      %36 = sbr.rel (0) target = $region17
    $region16: #{tpu_custom_call.1} parent=1 // pred_region
      %37 = dma.done [#allocation8], 512
    $region17: #{tpu_custom_call.1} parent=1 // pred_fallthru
      _
    %v38 = vld [vmem:[#allocation4] sm:$0xff]
    %v39 = vld [vmem:[#allocation4 + $0x8] sm:$0xff]
    %v40 = vld [vmem:[#allocation4 + $0x10] sm:$0xff]
    %v41 = vld [vmem:[#allocation4 + $0x18] sm:$0xff]
    %s42 = sld [smem:[#allocation3]]
    %v43 = vstv %s42
    %v44 = vmul.f32 %v38, %v43
    %v45 = vmul.f32 %v39, %v43
    %v46 = vmul.f32 %v40, %v43
    %v47 = vmul.f32 %v41, %v43
    %v48 = vld [vmem:[#allocation7] sm:$0xff]
    %v49 = vld [vmem:[#allocation7 + $0x8] sm:$0xff]
    %v50 = vld [vmem:[#allocation7 + $0x10] sm:$0xff]
    %v51 = vld [vmem:[#allocation7 + $0x18] sm:$0xff]
    %v52 = vmul.f32 %v48, 0.25
    %v53 = vmul.f32 %v49, 0.25
    %v54 = vmul.f32 %v50, 0.25
    %v55 = vmul.f32 %v51, 0.25
    %v56 = vadd.f32 %v44, %v52
    %v57 = vadd.f32 %v45, %v53
    %v58 = vadd.f32 %v46, %v54
    %v59 = vadd.f32 %v47, %v55
    %60 = vst [vmem:[#allocation9] sm:$0xff] %v56
    %61 = vst [vmem:[#allocation9 + $0x8] sm:$0xff] %v57
    %62 = vst [vmem:[#allocation9 + $0x10] sm:$0xff] %v58
    %63 = vst [vmem:[#allocation9 + $0x18] sm:$0xff] %v59
    // Predicated region
    $region18: #{tpu_custom_call.1} parent=1 // pred_check
      _
    $region19: #{tpu_custom_call.1} parent=1 // pred_check_branch
      %65 = sbr.rel (0) target = $region21
    $region20: #{tpu_custom_call.1} parent=1 // pred_region
      %s67 = ssub.s32 512, 512
      %68 = vsyncadd [#allocation6], %s67
      %s70 = sshll.u32 [#allocation9], 4
      %s71 = int_to_ptr.vmem [resolvable:$true] %s70
      %73 = dma.vmem_to_hbm [thread:$0]  %s71, 512, %s3, [#allocation6]
    $region21: #{tpu_custom_call.1} parent=1 // pred_fallthru
      _
    // Predicated region
    $region22: #{tpu_custom_call.1} parent=1 // pred_check
      _
    $region23: #{tpu_custom_call.1} parent=1 // pred_check_branch
      %75 = sbr.rel (0) target = $region25
    $region24: #{tpu_custom_call.1} parent=1 // pred_region
      %76 = dma.done [#allocation6], 512
    $region25: #{tpu_custom_call.1} parent=1 // pred_fallthru
      _
    %77 = vsyncpa [#allocation5], 1
    %78 = vsyncpa [#allocation8], 1
    %79 = vsyncpa [#allocation6], 1

</llo_original>
